<compile_context>
chip_gen: v7x
topology: tpu7x:2x2x1
jax: 0.10.0
libtpu: 0.0.40
codegen_flags: <defaults>
</compile_context>

<pallas_src>
import math

import jax
import jax.numpy as jnp
from jax.experimental import pallas as pl
from jax.experimental.pallas import tpu as pltpu

_LANE = 128
_SUBLANE = 8


def _round_up(n, m):
    return ((n + m - 1) // m) * m


def _pick_block_batch(B):
    """Pick batch tile TM from B.

    Small batches: one tile covering the (sublane-padded) batch -- splitting a
    tiny batch only adds ~0.35us/step grid overhead.  Larger batches: tiles as
    large as possible (cap 1024 rows) while guaranteeing >= 2 grid steps so the
    batch axis can shard across v7x's two TensorCores."""
    b8 = _round_up(max(B, 1), _SUBLANE)
    if b8 <= 256:
        return b8
    return min(1024, _round_up(pl.cdiv(b8, 2), 256))


def _actor_kernel(ma_ref, x_ref,
                  w1_ref, b1_ref, w2_ref, b2_ref,
                  w3_ref, b3_ref, w4_ref, b4_ref, out_ref):
    cdt = w1_ref.dtype            # bf16 MXU-input dtype
    max_action = ma_ref[0, 0]     # scalar from SMEM

    # fc1 + relu (x arrives bf16 -> no in-kernel pack before the first dot)
    h = jnp.dot(x_ref[...], w1_ref[...], preferred_element_type=jnp.float32)
    h = jnp.maximum(h + b1_ref[...], 0.0)
    # fc2 + relu
    h = jnp.dot(h.astype(cdt), w2_ref[...], preferred_element_type=jnp.float32)
    h = jnp.maximum(h + b2_ref[...], 0.0)
    # fc3 + relu
    h = jnp.dot(h.astype(cdt), w3_ref[...], preferred_element_type=jnp.float32)
    h = jnp.maximum(h + b3_ref[...], 0.0)
    # action_out + tanh, scaled by max_action (elementwise kept in f32)
    a = jnp.dot(h.astype(cdt), w4_ref[...], preferred_element_type=jnp.float32)
    a = max_action * jnp.tanh(a + b4_ref[...])
    out_ref[...] = a.astype(out_ref.dtype)   # lane-dense bf16 store


def actor_forward(x, params, max_action, action_dim, *, block_batch=None):
    """x: [B, in_dim] float32.  params: lane-padded bf16 weights / f32 biases."""
    B, in_dim = x.shape
    in_pad = params["w1"].shape[0]
    hidden = params["w1"].shape[1]
    act_pad = params["w4"].shape[1]

    TM = int(block_batch) if block_batch is not None else _pick_block_batch(B)
    TM = _round_up(TM, _SUBLANE)
    B_pad = _round_up(max(B, 1), TM)
    grid = (B_pad // TM,)

    # Single fused pad+cast staging op: rows padded to a TM multiple, feature
    # columns padded to the 128-lane width, dtype bf16 (half the DMA bytes).
    # TODO(synk): produce x lane-padded bf16 directly at the obs||goal concat /
    # replay-buffer producer to avoid this staging copy entirely.
    x_p = jnp.zeros((B_pad, in_pad), jnp.bfloat16).at[:B, :in_dim].set(
        x.astype(jnp.bfloat16))
    ma = jnp.full((1, 1), max_action, jnp.float32)

    const = lambda i: (0, 0)          # weights/biases: same block every step
    wspec = lambda shape: pl.BlockSpec(shape, const)

    w_bytes = sum(int(params[k].size) * params[k].dtype.itemsize
                  for k in params)
    cost = pl.CostEstimate(
        flops=2 * B_pad * (in_pad * hidden + 2 * hidden * hidden
                           + hidden * act_pad),
        transcendentals=B_pad * act_pad,
        bytes_accessed=(int(x_p.size) * 2      # x streamed once, bf16
                        + w_bytes              # weights fetched once per call
                        + B_pad * act_pad * 2  # bf16 output writeback
                        ),
    )

    ckw = dict(dimension_semantics=("parallel",))
    if TM >= 2048:
        # headroom for the three (TM, 256) f32 inter-layer activations
        ckw["vmem_limit_bytes"] = 64 * 1024 * 1024
    compiler_params = pltpu.CompilerParams(**ckw)

    out = pl.pallas_call(
        _actor_kernel,
        out_shape=jax.ShapeDtypeStruct((B_pad, act_pad), jnp.bfloat16),
        grid=grid,
        in_specs=[
            pl.BlockSpec(memory_space=pltpu.MemorySpace.SMEM),   # max_action
            pl.BlockSpec((TM, in_pad), lambda i: (i, 0)),        # x tile
            wspec((in_pad, hidden)), wspec((1, hidden)),         # fc1
            wspec((hidden, hidden)), wspec((1, hidden)),         # fc2
            wspec((hidden, hidden)), wspec((1, hidden)),         # fc3
            wspec((hidden, act_pad)), wspec((1, act_pad)),       # action_out
        ],
        out_specs=pl.BlockSpec((TM, act_pad), lambda i: (i, 0)),
        compiler_params=compiler_params,
        cost_estimate=cost,
    )(ma, x_p,
      params["w1"], params["b1"], params["w2"], params["b2"],
      params["w3"], params["b3"], params["w4"], params["b4"])

    return out[:B, :action_dim].astype(jnp.float32)


def init_actor_params(key, in_dim, hidden, action_dim, *,
                      weight_dtype=jnp.bfloat16):
    """nn.Linear-style U(-1/sqrt(fan_in), 1/sqrt(fan_in)) init.

    Weights stored transposed ([in, out]) vs PyTorch and zero-padded so K of
    fc1 and N of action_out are lane (128) aligned.  Biases stay f32."""
    in_pad = _round_up(in_dim, _LANE)
    act_pad = _round_up(action_dim, _LANE)
    real = [(in_dim, hidden), (hidden, hidden), (hidden, hidden),
            (hidden, action_dim)]
    padded = [(in_pad, hidden), (hidden, hidden), (hidden, hidden),
              (hidden, act_pad)]
    params = {}
    for i, ((fi, fo), (pi, po)) in enumerate(zip(real, padded), start=1):
        key, kw, kb = jax.random.split(key, 3)
        bound = 1.0 / math.sqrt(fi)
        w = jax.random.uniform(kw, (fi, fo), jnp.float32, -bound, bound)
        b = jax.random.uniform(kb, (1, fo), jnp.float32, -bound, bound)
        params[f"w{i}"] = (jnp.zeros((pi, po), jnp.float32)
                           .at[:fi, :fo].set(w).astype(weight_dtype))
        params[f"b{i}"] = jnp.zeros((1, po), jnp.float32).at[:, :fo].set(b)
    return params


def actor_reference(x, params, max_action, action_dim):
    """Plain-JAX reference using the same padded bf16 weights / f32 math
    (output kept f32, i.e. un-quantized relative to the kernel's bf16 store)."""
    in_pad = params["w1"].shape[0]
    cdt = params["w1"].dtype
    h = jnp.zeros((x.shape[0], in_pad), cdt).at[:, :x.shape[1]].set(
        x.astype(cdt))
    for i in (1, 2, 3):
        h = jnp.dot(h, params[f"w{i}"], preferred_element_type=jnp.float32)
        h = jnp.maximum(h + params[f"b{i}"], 0.0).astype(cdt)
    a = jnp.dot(h, params["w4"], preferred_element_type=jnp.float32)
    a = max_action * jnp.tanh(a + params["b4"])
    return a[:, :action_dim]


if __name__ == "__main__":
    # Synthetic env_params (HER enabled => input dim = obs_dim + goal_dim).
    env_params = dict(obs_dim=16, goal_dim=8, action_dim=4, max_action=1.5)
    her = True

    in_dim = env_params["obs_dim"] + (env_params["goal_dim"] if her else 0)
    hidden = 256
    action_dim = env_params["action_dim"]
    max_action = float(env_params["max_action"])

    key = jax.random.PRNGKey(0)
    key, kx, kx2 = jax.random.split(key, 3)
    params = init_actor_params(key, in_dim, hidden, action_dim,
                               weight_dtype=jnp.bfloat16)

    # bf16 output store quantizes tanh*max_action to ~0.2% rel error.
    ATOL, RTOL = 1e-2, 1e-2

    # Small demo batch: auto tile -> single 8-row tile, grid=(1,).
    batch = 2
    x = jax.random.normal(kx, (batch, in_dim), jnp.float32)
    actions = jax.block_until_ready(
        actor_forward(x, params, max_action, action_dim))
    ref = actor_reference(x, params, max_action, action_dim)
    assert actions.shape == (batch, action_dim)
    assert jnp.allclose(actions, ref, atol=ATOL, rtol=RTOL)

    # Larger batch: auto tile picks TM=256 -> grid=(2,), exercising the
    # multi-tile / dual-TensorCore path plus ragged batch padding.
    batch2 = 300
    x2 = jax.random.normal(kx2, (batch2, in_dim), jnp.float32)
    actions2 = jax.block_until_ready(
        actor_forward(x2, params, max_action, action_dim))
    ref2 = actor_reference(x2, params, max_action, action_dim)
    assert actions2.shape == (batch2, action_dim)
    assert jnp.allclose(actions2, ref2, atol=ATOL, rtol=RTOL)

    # Explicit block_batch override (single 512-row tile) still correct.
    actions3 = jax.block_until_ready(
        actor_forward(x2, params, max_action, action_dim, block_batch=512))
    assert jnp.allclose(actions3, ref2, atol=ATOL, rtol=RTOL)

    print("KERNEL_OK")
</pallas_src>

<mosaic_0001>
module attributes {stable_mosaic.version = 11 : i64} {
  func.func @_actor_kernel(%arg0: i32, %arg1: memref<1x1xf32, #tpu.memory_space<smem>>, %arg2: memref<8x128xbf16, #tpu.memory_space<vmem>>, %arg3: memref<128x256xbf16, #tpu.memory_space<vmem>>, %arg4: memref<1x256xf32, #tpu.memory_space<vmem>>, %arg5: memref<256x256xbf16, #tpu.memory_space<vmem>>, %arg6: memref<1x256xf32, #tpu.memory_space<vmem>>, %arg7: memref<256x256xbf16, #tpu.memory_space<vmem>>, %arg8: memref<1x256xf32, #tpu.memory_space<vmem>>, %arg9: memref<256x128xbf16, #tpu.memory_space<vmem>>, %arg10: memref<1x128xf32, #tpu.memory_space<vmem>>, %arg11: memref<8x128xbf16, #tpu.memory_space<vmem>>) attributes {dimension_semantics = [#tpu.dimension_semantics<parallel>], iteration_bounds = array<i64: 1>, scalar_prefetch = 0 : i64, scratch_operands = 0 : i64, tpu.core_type = #tpu.core_type<tc>, window_params = [{transform_indices = @transform_0, window_bounds = array<i64: 1, 1>}, {transform_indices = @transform_1, window_bounds = array<i64: 8, 128>}, {pipeline_mode = #tpu.pipeline_mode<synchronous>, transform_indices = @transform_2, window_bounds = array<i64: 128, 256>}, {pipeline_mode = #tpu.pipeline_mode<synchronous>, transform_indices = @transform_3, window_bounds = array<i64: 1, 256>}, {pipeline_mode = #tpu.pipeline_mode<synchronous>, transform_indices = @transform_4, window_bounds = array<i64: 256, 256>}, {pipeline_mode = #tpu.pipeline_mode<synchronous>, transform_indices = @transform_5, window_bounds = array<i64: 1, 256>}, {pipeline_mode = #tpu.pipeline_mode<synchronous>, transform_indices = @transform_6, window_bounds = array<i64: 256, 256>}, {pipeline_mode = #tpu.pipeline_mode<synchronous>, transform_indices = @transform_7, window_bounds = array<i64: 1, 256>}, {pipeline_mode = #tpu.pipeline_mode<synchronous>, transform_indices = @transform_8, window_bounds = array<i64: 256, 128>}, {pipeline_mode = #tpu.pipeline_mode<synchronous>, transform_indices = @transform_9, window_bounds = array<i64: 1, 128>}, {transform_indices = @transform_10, window_bounds = array<i64: 8, 128>}]} {
    %c0 = arith.constant 0 : index
    %c0_0 = arith.constant 0 : index
    %0 = memref.load %arg1[%c0, %c0_0] : memref<1x1xf32, #tpu.memory_space<smem>>
    %c0_1 = arith.constant 0 : index
    %c0_2 = arith.constant 0 : index
    %1 = vector.load %arg2[%c0_1, %c0_2] : memref<8x128xbf16, #tpu.memory_space<vmem>>, vector<8x128xbf16>
    %c0_3 = arith.constant 0 : index
    %c0_4 = arith.constant 0 : index
    %2 = vector.load %arg3[%c0_3, %c0_4] : memref<128x256xbf16, #tpu.memory_space<vmem>>, vector<128x256xbf16>
    %cst = arith.constant dense<0.000000e+00> : vector<8x256xf32>
    %3 = tpu.matmul %1, %2, %cst {dimension_numbers = #tpu.dot_dimension_numbers<[1], [0], [0], [1], [0, 0, 1, 1], [], []>} : vector<8x128xbf16>, vector<128x256xbf16>, vector<8x256xf32> -> vector<8x256xf32>
    %c0_5 = arith.constant 0 : index
    %c0_6 = arith.constant 0 : index
    %4 = vector.load %arg4[%c0_5, %c0_6] : memref<1x256xf32, #tpu.memory_space<vmem>>, vector<1x256xf32>
    %5 = vector.broadcast %4 : vector<1x256xf32> to vector<8x256xf32>
    %6 = arith.addf %3, %5 : vector<8x256xf32>
    %cst_7 = arith.constant 0.000000e+00 : f32
    %7 = vector.broadcast %cst_7 : f32 to vector<8x256xf32>
    %8 = arith.maximumf %6, %7 : vector<8x256xf32>
    %9 = arith.truncf %8 : vector<8x256xf32> to vector<8x256xbf16>
    %c0_8 = arith.constant 0 : index
    %c0_9 = arith.constant 0 : index
    %10 = vector.load %arg5[%c0_8, %c0_9] : memref<256x256xbf16, #tpu.memory_space<vmem>>, vector<256x256xbf16>
    %cst_10 = arith.constant dense<0.000000e+00> : vector<8x256xf32>
    %11 = tpu.matmul %9, %10, %cst_10 {dimension_numbers = #tpu.dot_dimension_numbers<[1], [0], [0], [1], [0, 0, 1, 1], [], []>} : vector<8x256xbf16>, vector<256x256xbf16>, vector<8x256xf32> -> vector<8x256xf32>
    %c0_11 = arith.constant 0 : index
    %c0_12 = arith.constant 0 : index
    %12 = vector.load %arg6[%c0_11, %c0_12] : memref<1x256xf32, #tpu.memory_space<vmem>>, vector<1x256xf32>
    %13 = vector.broadcast %12 : vector<1x256xf32> to vector<8x256xf32>
    %14 = arith.addf %11, %13 : vector<8x256xf32>
    %cst_13 = arith.constant 0.000000e+00 : f32
    %15 = vector.broadcast %cst_13 : f32 to vector<8x256xf32>
    %16 = arith.maximumf %14, %15 : vector<8x256xf32>
    %17 = arith.truncf %16 : vector<8x256xf32> to vector<8x256xbf16>
    %c0_14 = arith.constant 0 : index
    %c0_15 = arith.constant 0 : index
    %18 = vector.load %arg7[%c0_14, %c0_15] : memref<256x256xbf16, #tpu.memory_space<vmem>>, vector<256x256xbf16>
    %cst_16 = arith.constant dense<0.000000e+00> : vector<8x256xf32>
    %19 = tpu.matmul %17, %18, %cst_16 {dimension_numbers = #tpu.dot_dimension_numbers<[1], [0], [0], [1], [0, 0, 1, 1], [], []>} : vector<8x256xbf16>, vector<256x256xbf16>, vector<8x256xf32> -> vector<8x256xf32>
    %c0_17 = arith.constant 0 : index
    %c0_18 = arith.constant 0 : index
    %20 = vector.load %arg8[%c0_17, %c0_18] : memref<1x256xf32, #tpu.memory_space<vmem>>, vector<1x256xf32>
    %21 = vector.broadcast %20 : vector<1x256xf32> to vector<8x256xf32>
    %22 = arith.addf %19, %21 : vector<8x256xf32>
    %cst_19 = arith.constant 0.000000e+00 : f32
    %23 = vector.broadcast %cst_19 : f32 to vector<8x256xf32>
    %24 = arith.maximumf %22, %23 : vector<8x256xf32>
    %25 = arith.truncf %24 : vector<8x256xf32> to vector<8x256xbf16>
    %c0_20 = arith.constant 0 : index
    %c0_21 = arith.constant 0 : index
    %26 = vector.load %arg9[%c0_20, %c0_21] : memref<256x128xbf16, #tpu.memory_space<vmem>>, vector<256x128xbf16>
    %cst_22 = arith.constant dense<0.000000e+00> : vector<8x128xf32>
    %27 = tpu.matmul %25, %26, %cst_22 {dimension_numbers = #tpu.dot_dimension_numbers<[1], [0], [0], [1], [0, 0, 1, 1], [], []>} : vector<8x256xbf16>, vector<256x128xbf16>, vector<8x128xf32> -> vector<8x128xf32>
    %c0_23 = arith.constant 0 : index
    %c0_24 = arith.constant 0 : index
    %28 = vector.load %arg10[%c0_23, %c0_24] : memref<1x128xf32, #tpu.memory_space<vmem>>, vector<1x128xf32>
    %29 = vector.broadcast %28 : vector<1x128xf32> to vector<8x128xf32>
    %30 = arith.addf %27, %29 : vector<8x128xf32>
    %31 = math.tanh %30 : vector<8x128xf32>
    %32 = vector.broadcast %0 : f32 to vector<8x128xf32>
    %33 = arith.mulf %32, %31 : vector<8x128xf32>
    %34 = arith.truncf %33 : vector<8x128xf32> to vector<8x128xbf16>
    %c0_25 = arith.constant 0 : index
    %c0_26 = arith.constant 0 : index
    %35 = vector.load %arg11[%c0_25, %c0_26] : memref<8x128xbf16, #tpu.memory_space<vmem>>, vector<8x128xbf16>
    tpu.vector_store %arg11[%c0_25, %c0_26], %34 {strides = array<i32>} : memref<8x128xbf16, #tpu.memory_space<vmem>>, vector<8x128xbf16>,
    return
  }
  func.func @transform_0(%arg0: i32) -> (i32, i32) {
    %c0_i32 = arith.constant 0 : i32
    %c0_i32_0 = arith.constant 0 : i32
    %c0_i32_1 = arith.constant 0 : i32
    return %c0_i32, %c0_i32_0 : i32, i32
  }
  func.func @transform_1(%arg0: i32) -> (i32, i32) {
    %c0_i32 = arith.constant 0 : i32
    %c0_i32_0 = arith.constant 0 : i32
    return %arg0, %c0_i32 : i32, i32
  }
  func.func @transform_2(%arg0: i32) -> (i32, i32) {
    %c0_i32 = arith.constant 0 : i32
    %c0_i32_0 = arith.constant 0 : i32
    %c0_i32_1 = arith.constant 0 : i32
    return %c0_i32, %c0_i32_0 : i32, i32
  }
  func.func @transform_3(%arg0: i32) -> (i32, i32) {
    %c0_i32 = arith.constant 0 : i32
    %c0_i32_0 = arith.constant 0 : i32
    %c0_i32_1 = arith.constant 0 : i32
    return %c0_i32, %c0_i32_0 : i32, i32
  }
  func.func @transform_4(%arg0: i32) -> (i32, i32) {
    %c0_i32 = arith.constant 0 : i32
    %c0_i32_0 = arith.constant 0 : i32
    %c0_i32_1 = arith.constant 0 : i32
    return %c0_i32, %c0_i32_0 : i32, i32
  }
  func.func @transform_5(%arg0: i32) -> (i32, i32) {
    %c0_i32 = arith.constant 0 : i32
    %c0_i32_0 = arith.constant 0 : i32
    %c0_i32_1 = arith.constant 0 : i32
    return %c0_i32, %c0_i32_0 : i32, i32
  }
  func.func @transform_6(%arg0: i32) -> (i32, i32) {
    %c0_i32 = arith.constant 0 : i32
    %c0_i32_0 = arith.constant 0 : i32
    %c0_i32_1 = arith.constant 0 : i32
    return %c0_i32, %c0_i32_0 : i32, i32
  }
  func.func @transform_7(%arg0: i32) -> (i32, i32) {
    %c0_i32 = arith.constant 0 : i32
    %c0_i32_0 = arith.constant 0 : i32
    %c0_i32_1 = arith.constant 0 : i32
    return %c0_i32, %c0_i32_0 : i32, i32
  }
  func.func @transform_8(%arg0: i32) -> (i32, i32) {
    %c0_i32 = arith.constant 0 : i32
    %c0_i32_0 = arith.constant 0 : i32
    %c0_i32_1 = arith.constant 0 : i32
    return %c0_i32, %c0_i32_0 : i32, i32
  }
  func.func @transform_9(%arg0: i32) -> (i32, i32) {
    %c0_i32 = arith.constant 0 : i32
    %c0_i32_0 = arith.constant 0 : i32
    %c0_i32_1 = arith.constant 0 : i32
    return %c0_i32, %c0_i32_0 : i32, i32
  }
  func.func @transform_10(%arg0: i32) -> (i32, i32) {
    %c0_i32 = arith.constant 0 : i32
    %c0_i32_0 = arith.constant 0 : i32
    return %arg0, %c0_i32 : i32, i32
  }
}

</mosaic_0001>

<llo_original>
// kernel: tpu_custom_call.1
$region0: #{tpu_custom_call.1}
  #allocation0 [shape = 'u32[]', space=smem, size = 0x4, offset = 0x4, fixed_abs, tag = 'smem constant byte address 0x4 - core index']
  #allocation1 [shape = 'u32[144,128]{1,0:T(1,128)}', space=vmem, size = 0x12000, scoped, tag = 'internal scratch']
  #allocation2 [shape = 'f32[1,1]{1,0:T(1,128)S(6)}', space=smem, size = 0x200, scoped, tag = 'scoped memory for tpu_custom_call.1']
  %s0 = inlined_call_operand.<no memory space> [shape: f32[1,1], index: 0, kind: input, shape index: {}]
  %s1 = inlined_call_operand.hbm [shape: bf16[8,128], index: 1, kind: input, shape index: {}]
  %s2 = inlined_call_operand.hbm [shape: bf16[128,256], index: 2, kind: input, shape index: {}]
  %s3 = inlined_call_operand.vmem [shape: f32[1,256], index: 3, kind: input, shape index: {}]
  %s4 = inlined_call_operand.hbm [shape: bf16[256,256], index: 4, kind: input, shape index: {}]
  %s5 = inlined_call_operand.vmem [shape: f32[1,256], index: 5, kind: input, shape index: {}]
  %s6 = inlined_call_operand.hbm [shape: bf16[256,256], index: 6, kind: input, shape index: {}]
  %s7 = inlined_call_operand.vmem [shape: f32[1,256], index: 7, kind: input, shape index: {}]
  %s8 = inlined_call_operand.hbm [shape: bf16[256,128], index: 8, kind: input, shape index: {}]
  %s9 = inlined_call_operand.vmem [shape: f32[1,128], index: 9, kind: input, shape index: {}]
  %s10 = inlined_call_operand.hbm [shape: bf16[8,128], index: 10, kind: output, shape index: {}]
  %s11 = sld [smem:[#allocation0]]
  $region70: #{tpu_custom_call.1} parent=0
    _
  %s13 = ssub.s32 1, %s11
  %s14 = scalar_select 0, %s13, %s11
  %15 = sst [smem:[#allocation2]] %s0
  $region1: #{tpu_custom_call.1} parent=0
    #allocation3 [shape = 'u8[2048]{0}', space=vmem, size = 0x800, scoped, tag = 'input window, operand 1, single buffered']
    #allocation4 [shape = 's32[1]{0}', space=sflag, size = 0x4, scoped, tag = 'scoped memory for tpu_custom_call.1']
    #allocation5 [shape = 's32[1]{0}', space=sflag, size = 0x4, scoped, tag = 'scoped memory for tpu_custom_call.1']
    #allocation6 [shape = 'u8[65536]{0}', space=vmem, size = 0x10000, scoped, tag = 'input window, operand 2, single buffered']
    #allocation7 [shape = 's32[1]{0}', space=sflag, size = 0x4, scoped, tag = 'scoped memory for tpu_custom_call.1']
    #allocation8 [shape = 'u8[131072]{0}', space=vmem, size = 0x20000, scoped, tag = 'input window, operand 4, single buffered']
    #allocation9 [shape = 'u8[131072]{0}', space=vmem, size = 0x20000, scoped, tag = 'input window, operand 6, single buffered']
    #allocation10 [shape = 's32[1]{0}', space=sflag, size = 0x4, scoped, tag = 'scoped memory for tpu_custom_call.1']
    #allocation11 [shape = 'u8[65536]{0}', space=vmem, size = 0x10000, scoped, tag = 'input window, operand 8, single buffered']
    #allocation12 [shape = 'u8[2048]{0}', space=vmem, size = 0x800, scoped, tag = 'output window, operand 0, single buffered']
    %16 = vsyncpa [#allocation4], 0
    %17 = vsyncpa [#allocation7], 0
    %18 = vsyncpa [#allocation10], 0
    %19 = vsyncpa [#allocation5], 0
    // Predicated region
    $region2: #{tpu_custom_call.1} parent=1 // pred_check
      _
    $region3: #{tpu_custom_call.1} parent=1 // pred_check_branch
      %21 = sbr.rel (0) target = $region5
    $region4: #{tpu_custom_call.1} parent=1 // pred_region
      _
    $region5: #{tpu_custom_call.1} parent=1 // pred_fallthru
      _
    // Predicated region
    $region6: #{tpu_custom_call.1} parent=1 // pred_check
      _
    $region7: #{tpu_custom_call.1} parent=1 // pred_check_branch
      %23 = sbr.rel (0) target = $region9
    $region8: #{tpu_custom_call.1} parent=1 // pred_region
      %s25 = ssub.s32 64, 64
      %26 = vsyncadd [#allocation4], %s25
      %s28 = sshll.u32 [#allocation3], 4
      %s29 = int_to_ptr.vmem [resolvable:$true] %s28
      %31 = dma.hbm_to_vmem [thread:$0]  %s1, 64, %s29, [#allocation4]
    $region9: #{tpu_custom_call.1} parent=1 // pred_fallthru
      _
    // Predicated region
    $region10: #{tpu_custom_call.1} parent=1 // pred_check
      _
    $region11: #{tpu_custom_call.1} parent=1 // pred_check_branch
      %33 = sbr.rel (0) target = $region13
    $region12: #{tpu_custom_call.1} parent=1 // pred_region
      %s35 = ssub.s32 2048, 2048
      %36 = vsyncadd [#allocation7], %s35
      %s37 = sshll.u32 [#allocation6], 4
      %s38 = int_to_ptr.vmem [resolvable:$true] %s37
      %43 = dma.hbm_to_vmem [thread:$0]  %s2, 2048, %s38, [#allocation7], 128, 128, 8
    $region13: #{tpu_custom_call.1} parent=1 // pred_fallthru
      _
    // Predicated region
    $region14: #{tpu_custom_call.1} parent=1 // pred_check
      _
    $region15: #{tpu_custom_call.1} parent=1 // pred_check_branch
      %45 = sbr.rel (0) target = $region17
    $region16: #{tpu_custom_call.1} parent=1 // pred_region
      _
    $region17: #{tpu_custom_call.1} parent=1 // pred_fallthru
      _
    // Predicated region
    $region18: #{tpu_custom_call.1} parent=1 // pred_check
      _
    $region19: #{tpu_custom_call.1} parent=1 // pred_check_branch
      %47 = sbr.rel (0) target = $region21
    $region20: #{tpu_custom_call.1} parent=1 // pred_region
      %s49 = ssub.s32 4096, 4096
      %50 = vsyncadd [#allocation7], %s49
      %s51 = sshll.u32 [#allocation8], 4
      %s52 = int_to_ptr.vmem [resolvable:$true] %s51
      %57 = dma.hbm_to_vmem [thread:$0]  %s4, 4096, %s52, [#allocation7], 128, 128, 8
    $region21: #{tpu_custom_call.1} parent=1 // pred_fallthru
      _
    // Predicated region
    $region22: #{tpu_custom_call.1} parent=1 // pred_check
      _
    $region23: #{tpu_custom_call.1} parent=1 // pred_check_branch
      %59 = sbr.rel (0) target = $region25
    $region24: #{tpu_custom_call.1} parent=1 // pred_region
      _
    $region25: #{tpu_custom_call.1} parent=1 // pred_fallthru
      _
    // Predicated region
    $region26: #{tpu_custom_call.1} parent=1 // pred_check
      _
    $region27: #{tpu_custom_call.1} parent=1 // pred_check_branch
      %61 = sbr.rel (0) target = $region29
    $region28: #{tpu_custom_call.1} parent=1 // pred_region
      %s63 = ssub.s32 4096, 4096
      %64 = vsyncadd [#allocation10], %s63
      %s65 = sshll.u32 [#allocation9], 4
      %s66 = int_to_ptr.vmem [resolvable:$true] %s65
      %71 = dma.hbm_to_vmem [thread:$0]  %s6, 4096, %s66, [#allocation10], 128, 128, 8
    $region29: #{tpu_custom_call.1} parent=1 // pred_fallthru
      _
    // Predicated region
    $region30: #{tpu_custom_call.1} parent=1 // pred_check
      _
    $region31: #{tpu_custom_call.1} parent=1 // pred_check_branch
      %73 = sbr.rel (0) target = $region33
    $region32: #{tpu_custom_call.1} parent=1 // pred_region
      _
    $region33: #{tpu_custom_call.1} parent=1 // pred_fallthru
      _
    // Predicated region
    $region34: #{tpu_custom_call.1} parent=1 // pred_check
      _
    $region35: #{tpu_custom_call.1} parent=1 // pred_check_branch
      %75 = sbr.rel (0) target = $region37
    $region36: #{tpu_custom_call.1} parent=1 // pred_region
      %s77 = ssub.s32 2048, 2048
      %78 = vsyncadd [#allocation10], %s77
      %s79 = sshll.u32 [#allocation11], 4
      %s80 = int_to_ptr.vmem [resolvable:$true] %s79
      %85 = dma.hbm_to_vmem [thread:$0]  %s8, 2048, %s80, [#allocation10], 64, 64, 4
    $region37: #{tpu_custom_call.1} parent=1 // pred_fallthru
      _
    // Predicated region
    $region38: #{tpu_custom_call.1} parent=1 // pred_check
      _
    $region39: #{tpu_custom_call.1} parent=1 // pred_check_branch
      %87 = sbr.rel (0) target = $region41
    $region40: #{tpu_custom_call.1} parent=1 // pred_region
      _
    $region41: #{tpu_custom_call.1} parent=1 // pred_fallthru
      _
    // Predicated region
    $region42: #{tpu_custom_call.1} parent=1 // pred_check
      _
    $region43: #{tpu_custom_call.1} parent=1 // pred_check_branch
      %89 = sbr.rel (0) target = $region45
    $region44: #{tpu_custom_call.1} parent=1 // pred_region
      %90 = dma.done [#allocation4], 64
    $region45: #{tpu_custom_call.1} parent=1 // pred_fallthru
      _
    // Predicated region
    $region46: #{tpu_custom_call.1} parent=1 // pred_check
      _
    $region47: #{tpu_custom_call.1} parent=1 // pred_check_branch
      %92 = sbr.rel (0) target = $region49
    $region48: #{tpu_custom_call.1} parent=1 // pred_region
      %93 = dma.done [#allocation7], 2048
    $region49: #{tpu_custom_call.1} parent=1 // pred_fallthru
      _
    // Predicated region
    $region50: #{tpu_custom_call.1} parent=1 // pred_check
      _
    $region51: #{tpu_custom_call.1} parent=1 // pred_check_branch
      %95 = sbr.rel (0) target = $region53
    $region52: #{tpu_custom_call.1} parent=1 // pred_region
      %96 = dma.done [#allocation7], 4096
    $region53: #{tpu_custom_call.1} parent=1 // pred_fallthru
      _
    // Predicated region
    $region54: #{tpu_custom_call.1} parent=1 // pred_check
      _
    $region55: #{tpu_custom_call.1} parent=1 // pred_check_branch
      %98 = sbr.rel (0) target = $region57
    $region56: #{tpu_custom_call.1} parent=1 // pred_region
      %99 = dma.done [#allocation10], 4096
    $region57: #{tpu_custom_call.1} parent=1 // pred_fallthru
      _
    // Predicated region
    $region58: #{tpu_custom_call.1} parent=1 // pred_check
      _
    $region59: #{tpu_custom_call.1} parent=1 // pred_check_branch
      %101 = sbr.rel (0) target = $region61
    $region60: #{tpu_custom_call.1} parent=1 // pred_region
      %102 = dma.done [#allocation10], 2048
    $region61: #{tpu_custom_call.1} parent=1 // pred_fallthru
      _
    %s104 = sld [smem:[#allocation2]]
    %v105 = vld [vmem:[#allocation3] sm:$0xf]
    %v106 = vld [vmem:[#allocation6] sm:$0xff]
    %v107 = vld [vmem:[#allocation6 + $0x8] sm:$0xff]
    %v108 = vld [vmem:[#allocation6 + $0x10] sm:$0xff]
    %v109 = vld [vmem:[#allocation6 + $0x18] sm:$0xff]
    %v110 = vld [vmem:[#allocation6 + $0x20] sm:$0xff]
    %v111 = vld [vmem:[#allocation6 + $0x28] sm:$0xff]
    %v112 = vld [vmem:[#allocation6 + $0x30] sm:$0xff]
    %v113 = vld [vmem:[#allocation6 + $0x38] sm:$0xff]
    %v114 = vld [vmem:[#allocation6 + $0x40] sm:$0xff]
    %v115 = vld [vmem:[#allocation6 + $0x48] sm:$0xff]
    %v116 = vld [vmem:[#allocation6 + $0x50] sm:$0xff]
    %v117 = vld [vmem:[#allocation6 + $0x58] sm:$0xff]
    %v118 = vld [vmem:[#allocation6 + $0x60] sm:$0xff]
    %v119 = vld [vmem:[#allocation6 + $0x68] sm:$0xff]
    %v120 = vld [vmem:[#allocation6 + $0x70] sm:$0xff]
    %v121 = vld [vmem:[#allocation6 + $0x78] sm:$0xff]
    %v122 = vld [vmem:[%s3] sm:$0x3]
    %v124 = vlaneseq
    %v125 = vshrl.u32 %v124, 7
    %v126 = vsub.s32 0, %v125
    %v127 = vrot.slane %v122, %v126
    %v128 = vlaneseq
    %v129 = vshrl.u32 %v128, 7
    %v130 = vsub.s32 1, %v129
    %v131 = vrot.slane %v122, %v130
    %v150 = vunpack.c.l.b16 %v106
    %v151 = vunpack.c.h.b16 %v106
    %v152 = vunpack.c.l.b16 %v107
    %v153 = vunpack.c.h.b16 %v107
    %v154 = vunpack.c.l.b16 %v108
    %v155 = vunpack.c.h.b16 %v108
    %v156 = vunpack.c.l.b16 %v109
    %v157 = vunpack.c.h.b16 %v109
    %v158 = vunpack.c.l.b16 %v110
    %v159 = vunpack.c.h.b16 %v110
    %v160 = vunpack.c.l.b16 %v111
    %v161 = vunpack.c.h.b16 %v111
    %v162 = vunpack.c.l.b16 %v112
    %v163 = vunpack.c.h.b16 %v112
    %v164 = vunpack.c.l.b16 %v113
    %v165 = vunpack.c.h.b16 %v113
    %v166 = vunpack.c.l.b16 %v114
    %v167 = vunpack.c.h.b16 %v114
    %v168 = vunpack.c.l.b16 %v115
    %v169 = vunpack.c.h.b16 %v115
    %v170 = vunpack.c.l.b16 %v116
    %v171 = vunpack.c.h.b16 %v116
    %v172 = vunpack.c.l.b16 %v117
    %v173 = vunpack.c.h.b16 %v117
    %v174 = vunpack.c.l.b16 %v118
    %v175 = vunpack.c.h.b16 %v118
    %v176 = vunpack.c.l.b16 %v119
    %v177 = vunpack.c.h.b16 %v119
    %v178 = vunpack.c.l.b16 %v120
    %v179 = vunpack.c.h.b16 %v120
    %v180 = vunpack.c.l.b16 %v121
    %v181 = vunpack.c.h.b16 %v121
    %v182 = vpack.c.b16 %v152, %v150
    %v183 = vpack.c.b16 %v153, %v151
    %v184 = vpack.c.b16 %v156, %v154
    %v185 = vpack.c.b16 %v157, %v155
    %v186 = vpack.c.b16 %v160, %v158
    %v187 = vpack.c.b16 %v161, %v159
    %v188 = vpack.c.b16 %v164, %v162
    %v189 = vpack.c.b16 %v165, %v163
    %v190 = vpack.c.b16 %v168, %v166
    %v191 = vpack.c.b16 %v169, %v167
    %v192 = vpack.c.b16 %v172, %v170
    %v193 = vpack.c.b16 %v173, %v171
    %v194 = vpack.c.b16 %v176, %v174
    %v195 = vpack.c.b16 %v177, %v175
    %v196 = vpack.c.b16 %v180, %v178
    %v197 = vpack.c.b16 %v181, %v179
    %214 = vmatprep.subr.bf16.mxu0 %v183
    %215 = vmatpush1.bf16.msra.mxu0 %v182
    %216 = vmatprep.subr.bf16.mxu0 %v185
    %217 = vmatpush1.bf16.msra.mxu0 %v184
    %218 = vmatprep.subr.bf16.mxu0 %v187
    %219 = vmatpush1.bf16.msra.mxu0 %v186
    %220 = vmatprep.subr.bf16.mxu0 %v189
    %221 = vmatpush1.bf16.msra.mxu0 %v188
    %222 = vmatprep.subr.bf16.mxu0 %v191
    %223 = vmatpush1.bf16.msra.mxu0 %v190
    %224 = vmatprep.subr.bf16.mxu0 %v193
    %225 = vmatpush1.bf16.msra.mxu0 %v192
    %226 = vmatprep.subr.bf16.mxu0 %v195
    %227 = vmatpush1.bf16.msra.mxu0 %v194
    %228 = vmatprep.subr.bf16.mxu0 %v197
    %229 = vmatpush1.bf16.msra.mxu0 %v196
    %230 = vmatprep.subr.bf16.mxu0 0
    %231 = vmatpush1.bf16.msra.mxu0 0
    %232 = vmatprep.subr.bf16.mxu0 0
    %233 = vmatpush1.bf16.msra.mxu0 0
    %234 = vmatprep.subr.bf16.mxu0 0
    %235 = vmatpush1.bf16.msra.mxu0 0
    %236 = vmatprep.subr.bf16.mxu0 0
    %237 = vmatpush1.bf16.msra.mxu0 0
    %238 = vmatprep.subr.bf16.mxu0 0
    %239 = vmatpush1.bf16.msra.mxu0 0
    %240 = vmatprep.subr.bf16.mxu0 0
    %241 = vmatpush1.bf16.msra.mxu0 0
    %242 = vmatprep.subr.bf16.mxu0 0
    %243 = vmatpush1.bf16.msra.mxu0 0
    %244 = vmatprep.subr.bf16.mxu0 0
    %245 = vmatpush1.bf16.msra.mxu0 0
    %246 = vmatprep.mubr.bf16.mxu0 0
    %247 = vmatmul.mubr.bf16.gmra.mrb[0].mxu0 %v105
    %v248 = vpop.f32.mrb[0].mxu0
    %v249 = vadd.f32 %v127, %v248
    %v250 = vpop.f32.mrb[0].mxu0
    %v251 = vadd.f32 %v131, %v250
    %v252 = vpop.f32.mrb[0].mxu0
    %v253 = vpop.f32.mrb[0].mxu0
    %254 = vdwg.mxu0
    %v255 = vmax.f32 %v249, 0.0
    %v256 = vmax.f32 %v251, 0.0
    %v257 = vpack.c.bf16 %v255, %v255
    %v258 = vpack.c.bf16 %v256, %v256
    %v259 = vld [vmem:[#allocation8] sm:$0xff]
    %v260 = vld [vmem:[#allocation8 + $0x8] sm:$0xff]
    %v261 = vld [vmem:[#allocation8 + $0x10] sm:$0xff]
    %v262 = vld [vmem:[#allocation8 + $0x18] sm:$0xff]
    %v263 = vld [vmem:[#allocation8 + $0x20] sm:$0xff]
    %v264 = vld [vmem:[#allocation8 + $0x28] sm:$0xff]
    %v265 = vld [vmem:[#allocation8 + $0x30] sm:$0xff]
    %v266 = vld [vmem:[#allocation8 + $0x38] sm:$0xff]
    %v267 = vld [vmem:[#allocation8 + $0x40] sm:$0xff]
    %v268 = vld [vmem:[#allocation8 + $0x48] sm:$0xff]
    %v269 = vld [vmem:[#allocation8 + $0x50] sm:$0xff]
    %v270 = vld [vmem:[#allocation8 + $0x58] sm:$0xff]
    %v271 = vld [vmem:[#allocation8 + $0x60] sm:$0xff]
    %v272 = vld [vmem:[#allocation8 + $0x68] sm:$0xff]
    %v273 = vld [vmem:[#allocation8 + $0x70] sm:$0xff]
    %v274 = vld [vmem:[#allocation8 + $0x78] sm:$0xff]
    %v275 = vld [vmem:[#allocation8 + $0x80] sm:$0xff]
    %v276 = vld [vmem:[#allocation8 + $0x88] sm:$0xff]
    %v277 = vld [vmem:[#allocation8 + $0x90] sm:$0xff]
    %v278 = vld [vmem:[#allocation8 + $0x98] sm:$0xff]
    %v279 = vld [vmem:[#allocation8 + $0xa0] sm:$0xff]
    %v280 = vld [vmem:[#allocation8 + $0xa8] sm:$0xff]
    %v281 = vld [vmem:[#allocation8 + $0xb0] sm:$0xff]
    %v282 = vld [vmem:[#allocation8 + $0xb8] sm:$0xff]
    %v283 = vld [vmem:[#allocation8 + $0xc0] sm:$0xff]
    %v284 = vld [vmem:[#allocation8 + $0xc8] sm:$0xff]
    %v285 = vld [vmem:[#allocation8 + $0xd0] sm:$0xff]
    %v286 = vld [vmem:[#allocation8 + $0xd8] sm:$0xff]
    %v287 = vld [vmem:[#allocation8 + $0xe0] sm:$0xff]
    %v288 = vld [vmem:[#allocation8 + $0xe8] sm:$0xff]
    %v289 = vld [vmem:[#allocation8 + $0xf0] sm:$0xff]
    %v290 = vld [vmem:[#allocation8 + $0xf8] sm:$0xff]
    %v291 = vld [vmem:[%s5] sm:$0x3]
    %v293 = vlaneseq
    %v294 = vshrl.u32 %v293, 7
    %v295 = vsub.s32 0, %v294
    %v296 = vrot.slane %v291, %v295
    %v297 = vlaneseq
    %v298 = vshrl.u32 %v297, 7
    %v299 = vsub.s32 1, %v298
    %v300 = vrot.slane %v291, %v299
    %v335 = vunpack.c.l.b16 %v259
    %v336 = vunpack.c.h.b16 %v259
    %v337 = vunpack.c.l.b16 %v260
    %v338 = vunpack.c.h.b16 %v260
    %v339 = vunpack.c.l.b16 %v261
    %v340 = vunpack.c.h.b16 %v261
    %v341 = vunpack.c.l.b16 %v262
    %v342 = vunpack.c.h.b16 %v262
    %v343 = vunpack.c.l.b16 %v263
    %v344 = vunpack.c.h.b16 %v263
    %v345 = vunpack.c.l.b16 %v264
    %v346 = vunpack.c.h.b16 %v264
    %v347 = vunpack.c.l.b16 %v265
    %v348 = vunpack.c.h.b16 %v265
    %v349 = vunpack.c.l.b16 %v266
    %v350 = vunpack.c.h.b16 %v266
    %v351 = vunpack.c.l.b16 %v267
    %v352 = vunpack.c.h.b16 %v267
    %v353 = vunpack.c.l.b16 %v268
    %v354 = vunpack.c.h.b16 %v268
    %v355 = vunpack.c.l.b16 %v269
    %v356 = vunpack.c.h.b16 %v269
    %v357 = vunpack.c.l.b16 %v270
    %v358 = vunpack.c.h.b16 %v270
    %v359 = vunpack.c.l.b16 %v271
    %v360 = vunpack.c.h.b16 %v271
    %v361 = vunpack.c.l.b16 %v272
    %v362 = vunpack.c.h.b16 %v272
    %v363 = vunpack.c.l.b16 %v273
    %v364 = vunpack.c.h.b16 %v273
    %v365 = vunpack.c.l.b16 %v274
    %v366 = vunpack.c.h.b16 %v274
    %v367 = vunpack.c.l.b16 %v275
    %v368 = vunpack.c.h.b16 %v275
    %v369 = vunpack.c.l.b16 %v276
    %v370 = vunpack.c.h.b16 %v276
    %v371 = vunpack.c.l.b16 %v277
    %v372 = vunpack.c.h.b16 %v277
    %v373 = vunpack.c.l.b16 %v278
    %v374 = vunpack.c.h.b16 %v278
    %v375 = vunpack.c.l.b16 %v279
    %v376 = vunpack.c.h.b16 %v279
    %v377 = vunpack.c.l.b16 %v280
    %v378 = vunpack.c.h.b16 %v280
    %v379 = vunpack.c.l.b16 %v281
    %v380 = vunpack.c.h.b16 %v281
    %v381 = vunpack.c.l.b16 %v282
    %v382 = vunpack.c.h.b16 %v282
    %v383 = vunpack.c.l.b16 %v283
    %v384 = vunpack.c.h.b16 %v283
    %v385 = vunpack.c.l.b16 %v284
    %v386 = vunpack.c.h.b16 %v284
    %v387 = vunpack.c.l.b16 %v285
    %v388 = vunpack.c.h.b16 %v285
    %v389 = vunpack.c.l.b16 %v286
    %v390 = vunpack.c.h.b16 %v286
    %v391 = vunpack.c.l.b16 %v287
    %v392 = vunpack.c.h.b16 %v287
    %v393 = vunpack.c.l.b16 %v288
    %v394 = vunpack.c.h.b16 %v288
    %v395 = vunpack.c.l.b16 %v289
    %v396 = vunpack.c.h.b16 %v289
    %v397 = vunpack.c.l.b16 %v290
    %v398 = vunpack.c.h.b16 %v290
    %v399 = vpack.c.b16 %v337, %v335
    %v400 = vpack.c.b16 %v338, %v336
    %v401 = vpack.c.b16 %v341, %v339
    %v402 = vpack.c.b16 %v342, %v340
    %v403 = vpack.c.b16 %v345, %v343
    %v404 = vpack.c.b16 %v346, %v344
    %v405 = vpack.c.b16 %v349, %v347
    %v406 = vpack.c.b16 %v350, %v348
    %v407 = vpack.c.b16 %v353, %v351
    %v408 = vpack.c.b16 %v354, %v352
    %v409 = vpack.c.b16 %v357, %v355
    %v410 = vpack.c.b16 %v358, %v356
    %v411 = vpack.c.b16 %v361, %v359
    %v412 = vpack.c.b16 %v362, %v360
    %v413 = vpack.c.b16 %v365, %v363
    %v414 = vpack.c.b16 %v366, %v364
    %v415 = vpack.c.b16 %v369, %v367
    %v416 = vpack.c.b16 %v370, %v368
    %v417 = vpack.c.b16 %v373, %v371
    %v418 = vpack.c.b16 %v374, %v372
    %v419 = vpack.c.b16 %v377, %v375
    %v420 = vpack.c.b16 %v378, %v376
    %v421 = vpack.c.b16 %v381, %v379
    %v422 = vpack.c.b16 %v382, %v380
    %v423 = vpack.c.b16 %v385, %v383
    %v424 = vpack.c.b16 %v386, %v384
    %v425 = vpack.c.b16 %v389, %v387
    %v426 = vpack.c.b16 %v390, %v388
    %v427 = vpack.c.b16 %v393, %v391
    %v428 = vpack.c.b16 %v394, %v392
    %v429 = vpack.c.b16 %v397, %v395
    %v430 = vpack.c.b16 %v398, %v396
    %463 = vmatprep.subr.bf16.mxu0 %v400
    %464 = vmatpush1.bf16.msra.mxu0 %v399
    %465 = vmatprep.subr.bf16.mxu0 %v402
    %466 = vmatpush1.bf16.msra.mxu0 %v401
    %467 = vmatprep.subr.bf16.mxu0 %v404
    %468 = vmatpush1.bf16.msra.mxu0 %v403
    %469 = vmatprep.subr.bf16.mxu0 %v406
    %470 = vmatpush1.bf16.msra.mxu0 %v405
    %471 = vmatprep.subr.bf16.mxu0 %v408
    %472 = vmatpush1.bf16.msra.mxu0 %v407
    %473 = vmatprep.subr.bf16.mxu0 %v410
    %474 = vmatpush1.bf16.msra.mxu0 %v409
    %475 = vmatprep.subr.bf16.mxu0 %v412
    %476 = vmatpush1.bf16.msra.mxu0 %v411
    %477 = vmatprep.subr.bf16.mxu0 %v414
    %478 = vmatpush1.bf16.msra.mxu0 %v413
    %479 = vmatprep.subr.bf16.mxu0 %v416
    %480 = vmatpush1.bf16.msra.mxu0 %v415
    %481 = vmatprep.subr.bf16.mxu0 %v418
    %482 = vmatpush1.bf16.msra.mxu0 %v417
    %483 = vmatprep.subr.bf16.mxu0 %v420
    %484 = vmatpush1.bf16.msra.mxu0 %v419
    %485 = vmatprep.subr.bf16.mxu0 %v422
    %486 = vmatpush1.bf16.msra.mxu0 %v421
    %487 = vmatprep.subr.bf16.mxu0 %v424
    %488 = vmatpush1.bf16.msra.mxu0 %v423
    %489 = vmatprep.subr.bf16.mxu0 %v426
    %490 = vmatpush1.bf16.msra.mxu0 %v425
    %491 = vmatprep.subr.bf16.mxu0 %v428
    %492 = vmatpush1.bf16.msra.mxu0 %v427
    %493 = vmatprep.subr.bf16.mxu0 %v430
    %494 = vmatpush1.bf16.msra.mxu0 %v429
    %495 = vmatprep.mubr.bf16.mxu0 %v258
    %496 = vmatmul.mubr.bf16.gmra.mrb[0].mxu0 %v257
    %v497 = vpop.f32.mrb[0].mxu0
    %v498 = vadd.f32 %v296, %v497
    %v499 = vpop.f32.mrb[0].mxu0
    %v500 = vadd.f32 %v300, %v499
    %v501 = vpop.f32.mrb[0].mxu0
    %v502 = vpop.f32.mrb[0].mxu0
    %503 = vdwg.mxu0
    %v504 = vmax.f32 %v498, 0.0
    %v505 = vmax.f32 %v500, 0.0
    %v506 = vpack.c.bf16 %v504, %v504
    %v507 = vpack.c.bf16 %v505, %v505
    %v508 = vld [vmem:[#allocation9] sm:$0xff]
    %v509 = vld [vmem:[#allocation9 + $0x8] sm:$0xff]
    %v510 = vld [vmem:[#allocation9 + $0x10] sm:$0xff]
    %v511 = vld [vmem:[#allocation9 + $0x18] sm:$0xff]
    %v512 = vld [vmem:[#allocation9 + $0x20] sm:$0xff]
    %v513 = vld [vmem:[#allocation9 + $0x28] sm:$0xff]
    %v514 = vld [vmem:[#allocation9 + $0x30] sm:$0xff]
    %v515 = vld [vmem:[#allocation9 + $0x38] sm:$0xff]
    %v516 = vld [vmem:[#allocation9 + $0x40] sm:$0xff]
    %v517 = vld [vmem:[#allocation9 + $0x48] sm:$0xff]
    %v518 = vld [vmem:[#allocation9 + $0x50] sm:$0xff]
    %v519 = vld [vmem:[#allocation9 + $0x58] sm:$0xff]
    %v520 = vld [vmem:[#allocation9 + $0x60] sm:$0xff]
    %v521 = vld [vmem:[#allocation9 + $0x68] sm:$0xff]
    %v522 = vld [vmem:[#allocation9 + $0x70] sm:$0xff]
    %v523 = vld [vmem:[#allocation9 + $0x78] sm:$0xff]
    %v524 = vld [vmem:[#allocation9 + $0x80] sm:$0xff]
    %v525 = vld [vmem:[#allocation9 + $0x88] sm:$0xff]
    %v526 = vld [vmem:[#allocation9 + $0x90] sm:$0xff]
    %v527 = vld [vmem:[#allocation9 + $0x98] sm:$0xff]
    %v528 = vld [vmem:[#allocation9 + $0xa0] sm:$0xff]
    %v529 = vld [vmem:[#allocation9 + $0xa8] sm:$0xff]
    %v530 = vld [vmem:[#allocation9 + $0xb0] sm:$0xff]
    %v531 = vld [vmem:[#allocation9 + $0xb8] sm:$0xff]
    %v532 = vld [vmem:[#allocation9 + $0xc0] sm:$0xff]
    %v533 = vld [vmem:[#allocation9 + $0xc8] sm:$0xff]
    %v534 = vld [vmem:[#allocation9 + $0xd0] sm:$0xff]
    %v535 = vld [vmem:[#allocation9 + $0xd8] sm:$0xff]
    %v536 = vld [vmem:[#allocation9 + $0xe0] sm:$0xff]
    %v537 = vld [vmem:[#allocation9 + $0xe8] sm:$0xff]
    %v538 = vld [vmem:[#allocation9 + $0xf0] sm:$0xff]
    %v539 = vld [vmem:[#allocation9 + $0xf8] sm:$0xff]
    %v540 = vld [vmem:[%s7] sm:$0x3]
    %v542 = vlaneseq
    %v543 = vshrl.u32 %v542, 7
    %v544 = vsub.s32 0, %v543
    %v545 = vrot.slane %v540, %v544
    %v546 = vlaneseq
    %v547 = vshrl.u32 %v546, 7
    %v548 = vsub.s32 1, %v547
    %v549 = vrot.slane %v540, %v548
    %v584 = vunpack.c.l.b16 %v508
    %v585 = vunpack.c.h.b16 %v508
    %v586 = vunpack.c.l.b16 %v509
    %v587 = vunpack.c.h.b16 %v509
    %v588 = vunpack.c.l.b16 %v510
    %v589 = vunpack.c.h.b16 %v510
    %v590 = vunpack.c.l.b16 %v511
    %v591 = vunpack.c.h.b16 %v511
    %v592 = vunpack.c.l.b16 %v512
    %v593 = vunpack.c.h.b16 %v512
    %v594 = vunpack.c.l.b16 %v513
    %v595 = vunpack.c.h.b16 %v513
    %v596 = vunpack.c.l.b16 %v514
    %v597 = vunpack.c.h.b16 %v514
    %v598 = vunpack.c.l.b16 %v515
    %v599 = vunpack.c.h.b16 %v515
    %v600 = vunpack.c.l.b16 %v516
    %v601 = vunpack.c.h.b16 %v516
    %v602 = vunpack.c.l.b16 %v517
    %v603 = vunpack.c.h.b16 %v517
    %v604 = vunpack.c.l.b16 %v518
    %v605 = vunpack.c.h.b16 %v518
    %v606 = vunpack.c.l.b16 %v519
    %v607 = vunpack.c.h.b16 %v519
    %v608 = vunpack.c.l.b16 %v520
    %v609 = vunpack.c.h.b16 %v520
    %v610 = vunpack.c.l.b16 %v521
    %v611 = vunpack.c.h.b16 %v521
    %v612 = vunpack.c.l.b16 %v522
    %v613 = vunpack.c.h.b16 %v522
    %v614 = vunpack.c.l.b16 %v523
    %v615 = vunpack.c.h.b16 %v523
    %v616 = vunpack.c.l.b16 %v524
    %v617 = vunpack.c.h.b16 %v524
    %v618 = vunpack.c.l.b16 %v525
    %v619 = vunpack.c.h.b16 %v525
    %v620 = vunpack.c.l.b16 %v526
    %v621 = vunpack.c.h.b16 %v526
    %v622 = vunpack.c.l.b16 %v527
    %v623 = vunpack.c.h.b16 %v527
    %v624 = vunpack.c.l.b16 %v528
    %v625 = vunpack.c.h.b16 %v528
    %v626 = vunpack.c.l.b16 %v529
    %v627 = vunpack.c.h.b16 %v529
    %v628 = vunpack.c.l.b16 %v530
    %v629 = vunpack.c.h.b16 %v530
    %v630 = vunpack.c.l.b16 %v531
    %v631 = vunpack.c.h.b16 %v531
    %v632 = vunpack.c.l.b16 %v532
    %v633 = vunpack.c.h.b16 %v532
    %v634 = vunpack.c.l.b16 %v533
    %v635 = vunpack.c.h.b16 %v533
    %v636 = vunpack.c.l.b16 %v534
    %v637 = vunpack.c.h.b16 %v534
    %v638 = vunpack.c.l.b16 %v535
    %v639 = vunpack.c.h.b16 %v535
    %v640 = vunpack.c.l.b16 %v536
    %v641 = vunpack.c.h.b16 %v536
    %v642 = vunpack.c.l.b16 %v537
    %v643 = vunpack.c.h.b16 %v537
    %v644 = vunpack.c.l.b16 %v538
    %v645 = vunpack.c.h.b16 %v538
    %v646 = vunpack.c.l.b16 %v539
    %v647 = vunpack.c.h.b16 %v539
    %v648 = vpack.c.b16 %v586, %v584
    %v649 = vpack.c.b16 %v587, %v585
    %v650 = vpack.c.b16 %v590, %v588
    %v651 = vpack.c.b16 %v591, %v589
    %v652 = vpack.c.b16 %v594, %v592
    %v653 = vpack.c.b16 %v595, %v593
    %v654 = vpack.c.b16 %v598, %v596
    %v655 = vpack.c.b16 %v599, %v597
    %v656 = vpack.c.b16 %v602, %v600
    %v657 = vpack.c.b16 %v603, %v601
    %v658 = vpack.c.b16 %v606, %v604
    %v659 = vpack.c.b16 %v607, %v605
    %v660 = vpack.c.b16 %v610, %v608
    %v661 = vpack.c.b16 %v611, %v609
    %v662 = vpack.c.b16 %v614, %v612
    %v663 = vpack.c.b16 %v615, %v613
    %v664 = vpack.c.b16 %v618, %v616
    %v665 = vpack.c.b16 %v619, %v617
    %v666 = vpack.c.b16 %v622, %v620
    %v667 = vpack.c.b16 %v623, %v621
    %v668 = vpack.c.b16 %v626, %v624
    %v669 = vpack.c.b16 %v627, %v625
    %v670 = vpack.c.b16 %v630, %v628
    %v671 = vpack.c.b16 %v631, %v629
    %v672 = vpack.c.b16 %v634, %v632
    %v673 = vpack.c.b16 %v635, %v633
    %v674 = vpack.c.b16 %v638, %v636
    %v675 = vpack.c.b16 %v639, %v637
    %v676 = vpack.c.b16 %v642, %v640
    %v677 = vpack.c.b16 %v643, %v641
    %v678 = vpack.c.b16 %v646, %v644
    %v679 = vpack.c.b16 %v647, %v645
    %712 = vmatprep.subr.bf16.mxu0 %v649
    %713 = vmatpush1.bf16.msra.mxu0 %v648
    %714 = vmatprep.subr.bf16.mxu0 %v651
    %715 = vmatpush1.bf16.msra.mxu0 %v650
    %716 = vmatprep.subr.bf16.mxu0 %v653
    %717 = vmatpush1.bf16.msra.mxu0 %v652
    %718 = vmatprep.subr.bf16.mxu0 %v655
    %719 = vmatpush1.bf16.msra.mxu0 %v654
    %720 = vmatprep.subr.bf16.mxu0 %v657
    %721 = vmatpush1.bf16.msra.mxu0 %v656
    %722 = vmatprep.subr.bf16.mxu0 %v659
    %723 = vmatpush1.bf16.msra.mxu0 %v658
    %724 = vmatprep.subr.bf16.mxu0 %v661
    %725 = vmatpush1.bf16.msra.mxu0 %v660
    %726 = vmatprep.subr.bf16.mxu0 %v663
    %727 = vmatpush1.bf16.msra.mxu0 %v662
    %728 = vmatprep.subr.bf16.mxu0 %v665
    %729 = vmatpush1.bf16.msra.mxu0 %v664
    %730 = vmatprep.subr.bf16.mxu0 %v667
    %731 = vmatpush1.bf16.msra.mxu0 %v666
    %732 = vmatprep.subr.bf16.mxu0 %v669
    %733 = vmatpush1.bf16.msra.mxu0 %v668
    %734 = vmatprep.subr.bf16.mxu0 %v671
    %735 = vmatpush1.bf16.msra.mxu0 %v670
    %736 = vmatprep.subr.bf16.mxu0 %v673
    %737 = vmatpush1.bf16.msra.mxu0 %v672
    %738 = vmatprep.subr.bf16.mxu0 %v675
    %739 = vmatpush1.bf16.msra.mxu0 %v674
    %740 = vmatprep.subr.bf16.mxu0 %v677
    %741 = vmatpush1.bf16.msra.mxu0 %v676
    %742 = vmatprep.subr.bf16.mxu0 %v679
    %743 = vmatpush1.bf16.msra.mxu0 %v678
    %744 = vmatprep.mubr.bf16.mxu0 %v507
    %745 = vmatmul.mubr.bf16.gmra.mrb[0].mxu0 %v506
    %v746 = vpop.f32.mrb[0].mxu0
    %v747 = vadd.f32 %v545, %v746
    %v748 = vpop.f32.mrb[0].mxu0
    %v749 = vadd.f32 %v549, %v748
    %v750 = vpop.f32.mrb[0].mxu0
    %v751 = vpop.f32.mrb[0].mxu0
    %752 = vdwg.mxu0
    %v753 = vmax.f32 %v747, 0.0
    %v754 = vmax.f32 %v749, 0.0
    %v755 = vpack.c.bf16 %v753, %v753
    %v756 = vpack.c.bf16 %v754, %v754
    %v757 = vld [vmem:[#allocation11] sm:$0xf]
    %v758 = vld [vmem:[#allocation11 + $0x4] sm:$0xf]
    %v759 = vld [vmem:[#allocation11 + $0x8] sm:$0xf]
    %v760 = vld [vmem:[#allocation11 + $0xc] sm:$0xf]
    %v761 = vld [vmem:[#allocation11 + $0x10] sm:$0xf]
    %v762 = vld [vmem:[#allocation11 + $0x14] sm:$0xf]
    %v763 = vld [vmem:[#allocation11 + $0x18] sm:$0xf]
    %v764 = vld [vmem:[#allocation11 + $0x1c] sm:$0xf]
    %v765 = vld [vmem:[#allocation11 + $0x20] sm:$0xf]
    %v766 = vld [vmem:[#allocation11 + $0x24] sm:$0xf]
    %v767 = vld [vmem:[#allocation11 + $0x28] sm:$0xf]
    %v768 = vld [vmem:[#allocation11 + $0x2c] sm:$0xf]
    %v769 = vld [vmem:[#allocation11 + $0x30] sm:$0xf]
    %v770 = vld [vmem:[#allocation11 + $0x34] sm:$0xf]
    %v771 = vld [vmem:[#allocation11 + $0x38] sm:$0xf]
    %v772 = vld [vmem:[#allocation11 + $0x3c] sm:$0xf]
    %v773 = vld [vmem:[#allocation11 + $0x40] sm:$0xf]
    %v774 = vld [vmem:[#allocation11 + $0x44] sm:$0xf]
    %v775 = vld [vmem:[#allocation11 + $0x48] sm:$0xf]
    %v776 = vld [vmem:[#allocation11 + $0x4c] sm:$0xf]
    %v777 = vld [vmem:[#allocation11 + $0x50] sm:$0xf]
    %v778 = vld [vmem:[#allocation11 + $0x54] sm:$0xf]
    %v779 = vld [vmem:[#allocation11 + $0x58] sm:$0xf]
    %v780 = vld [vmem:[#allocation11 + $0x5c] sm:$0xf]
    %v781 = vld [vmem:[#allocation11 + $0x60] sm:$0xf]
    %v782 = vld [vmem:[#allocation11 + $0x64] sm:$0xf]
    %v783 = vld [vmem:[#allocation11 + $0x68] sm:$0xf]
    %v784 = vld [vmem:[#allocation11 + $0x6c] sm:$0xf]
    %v785 = vld [vmem:[#allocation11 + $0x70] sm:$0xf]
    %v786 = vld [vmem:[#allocation11 + $0x74] sm:$0xf]
    %v787 = vld [vmem:[#allocation11 + $0x78] sm:$0xf]
    %v788 = vld [vmem:[#allocation11 + $0x7c] sm:$0xf]
    %v789 = vld [vmem:[%s9] sm:$0x1]
    %v791 = vlaneseq
    %v792 = vshrl.u32 %v791, 7
    %v793 = vsub.s32 0, %v792
    %v794 = vrot.slane %v789, %v793
    %v828 = vunpack.c.l.b16 %v757
    %v829 = vunpack.c.l.b16 %v758
    %v830 = vunpack.c.l.b16 %v759
    %v831 = vunpack.c.l.b16 %v760
    %v832 = vunpack.c.l.b16 %v761
    %v833 = vunpack.c.l.b16 %v762
    %v834 = vunpack.c.l.b16 %v763
    %v835 = vunpack.c.l.b16 %v764
    %v836 = vunpack.c.l.b16 %v765
    %v837 = vunpack.c.l.b16 %v766
    %v838 = vunpack.c.l.b16 %v767
    %v839 = vunpack.c.l.b16 %v768
    %v840 = vunpack.c.l.b16 %v769
    %v841 = vunpack.c.l.b16 %v770
    %v842 = vunpack.c.l.b16 %v771
    %v843 = vunpack.c.l.b16 %v772
    %v844 = vunpack.c.l.b16 %v773
    %v845 = vunpack.c.l.b16 %v774
    %v846 = vunpack.c.l.b16 %v775
    %v847 = vunpack.c.l.b16 %v776
    %v848 = vunpack.c.l.b16 %v777
    %v849 = vunpack.c.l.b16 %v778
    %v850 = vunpack.c.l.b16 %v779
    %v851 = vunpack.c.l.b16 %v780
    %v852 = vunpack.c.l.b16 %v781
    %v853 = vunpack.c.l.b16 %v782
    %v854 = vunpack.c.l.b16 %v783
    %v855 = vunpack.c.l.b16 %v784
    %v856 = vunpack.c.l.b16 %v785
    %v857 = vunpack.c.l.b16 %v786
    %v858 = vunpack.c.l.b16 %v787
    %v859 = vunpack.c.l.b16 %v788
    %v860 = vpack.c.b16 %v829, %v828
    %v861 = vpack.c.b16 %v831, %v830
    %v862 = vpack.c.b16 %v833, %v832
    %v863 = vpack.c.b16 %v835, %v834
    %v864 = vpack.c.b16 %v837, %v836
    %v865 = vpack.c.b16 %v839, %v838
    %v866 = vpack.c.b16 %v841, %v840
    %v867 = vpack.c.b16 %v843, %v842
    %v868 = vpack.c.b16 %v845, %v844
    %v869 = vpack.c.b16 %v847, %v846
    %v870 = vpack.c.b16 %v849, %v848
    %v871 = vpack.c.b16 %v851, %v850
    %v872 = vpack.c.b16 %v853, %v852
    %v873 = vpack.c.b16 %v855, %v854
    %v874 = vpack.c.b16 %v857, %v856
    %v875 = vpack.c.b16 %v859, %v858
    %892 = vmatprep.subr.bf16.mxu0 0
    %893 = vmatpush1.bf16.msra.mxu0 %v860
    %894 = vmatprep.subr.bf16.mxu0 0
    %895 = vmatpush1.bf16.msra.mxu0 %v861
    %896 = vmatprep.subr.bf16.mxu0 0
    %897 = vmatpush1.bf16.msra.mxu0 %v862
    %898 = vmatprep.subr.bf16.mxu0 0
    %899 = vmatpush1.bf16.msra.mxu0 %v863
    %900 = vmatprep.subr.bf16.mxu0 0
    %901 = vmatpush1.bf16.msra.mxu0 %v864
    %902 = vmatprep.subr.bf16.mxu0 0
    %903 = vmatpush1.bf16.msra.mxu0 %v865
    %904 = vmatprep.subr.bf16.mxu0 0
    %905 = vmatpush1.bf16.msra.mxu0 %v866
    %906 = vmatprep.subr.bf16.mxu0 0
    %907 = vmatpush1.bf16.msra.mxu0 %v867
    %908 = vmatprep.subr.bf16.mxu0 0
    %909 = vmatpush1.bf16.msra.mxu0 %v868
    %910 = vmatprep.subr.bf16.mxu0 0
    %911 = vmatpush1.bf16.msra.mxu0 %v869
    %912 = vmatprep.subr.bf16.mxu0 0
    %913 = vmatpush1.bf16.msra.mxu0 %v870
    %914 = vmatprep.subr.bf16.mxu0 0
    %915 = vmatpush1.bf16.msra.mxu0 %v871
    %916 = vmatprep.subr.bf16.mxu0 0
    %917 = vmatpush1.bf16.msra.mxu0 %v872
    %918 = vmatprep.subr.bf16.mxu0 0
    %919 = vmatpush1.bf16.msra.mxu0 %v873
    %920 = vmatprep.subr.bf16.mxu0 0
    %921 = vmatpush1.bf16.msra.mxu0 %v874
    %922 = vmatprep.subr.bf16.mxu0 0
    %923 = vmatpush1.bf16.msra.mxu0 %v875
    %924 = vmatprep.mubr.bf16.mxu0 %v756
    %925 = vmatmul.mubr.bf16.gmra.mrb[0].mxu0 %v755
    %v926 = vpop.f32.mrb[0].mxu0
    %v927 = vadd.f32 %v794, %v926
    %v928 = vpop.f32.mrb[0].mxu0
    %v929 = vpop.f32.mrb[0].mxu0
    %v930 = vpop.f32.mrb[0].mxu0
    %931 = vdwg.mxu0
    %v932 = vtanh.pop %v927
    %v933 = vstv %s104
    %v934 = vmul.f32 %v933, %v932
    %v935 = vpack.c.bf16 %v934, %v934
    %936 = vst [vmem:[#allocation12] sm:$0xf] %v935
    // Predicated region
    $region62: #{tpu_custom_call.1} parent=1 // pred_check
      _
    $region63: #{tpu_custom_call.1} parent=1 // pred_check_branch
      %938 = sbr.rel (0) target = $region65
    $region64: #{tpu_custom_call.1} parent=1 // pred_region
      %s940 = ssub.s32 64, 64
      %941 = vsyncadd [#allocation5], %s940
      %s943 = sshll.u32 [#allocation12], 4
      %s944 = int_to_ptr.vmem [resolvable:$true] %s943
      %946 = dma.vmem_to_hbm [thread:$0]  %s944, 64, %s10, [#allocation5]
    $region65: #{tpu_custom_call.1} parent=1 // pred_fallthru
      _
    // Predicated region
    $region66: #{tpu_custom_call.1} parent=1 // pred_check
      _
    $region67: #{tpu_custom_call.1} parent=1 // pred_check_branch
      %948 = sbr.rel (0) target = $region69
    $region68: #{tpu_custom_call.1} parent=1 // pred_region
      %949 = dma.done [#allocation5], 64
    $region69: #{tpu_custom_call.1} parent=1 // pred_fallthru
      _
    %950 = vsyncpa [#allocation4], 1
    %951 = vsyncpa [#allocation7], 1
    %952 = vsyncpa [#allocation10], 1
    %953 = vsyncpa [#allocation5], 1

</llo_original>
